<compile_context>
chip_gen: v6e
topology: v6e:2x2x1
jax: 0.10.0
libtpu: 0.0.40
codegen_flags: <defaults>
</compile_context>

<pallas_src>
import functools
import math

import jax
import jax.numpy as jnp
from jax.experimental import pallas as pl
from jax.experimental.pallas import tpu as pltpu


def classifier_kernel(x_ref, w_doc_ref, p_ref, out_ref, *, token_dim, rescaling):
    xb = x_ref[...]                          # [tb, T + C]  single tile load
    tokens = xb[:, :token_dim]               # [tb, T]   static lane slice
    mask = xb[:, token_dim:]                 # [tb, C]

    # document encoder: d = tanh(tokens @ W_doc)   (the "[:, 0, :]" CLS row)
    # NOTE: the 1/sqrt(DOC) scaling of d is folded into p_ref at param-prep time.
    d = jnp.tanh(jnp.dot(tokens, w_doc_ref[...],
                         preferred_element_type=jnp.float32))             # [tb, DOC]

    # scores = d @ p, with p = (relu(A @ X @ Wc) @ W).T * 1/sqrt(DOC) precomputed.
    scores = jnp.dot(d, p_ref[...], preferred_element_type=jnp.float32)   # [tb, C]

    if rescaling:                            # static flag -> no runtime branch
        scores = jnp.exp(scores)
    probs = jax.nn.sigmoid(scores)
    if rescaling:
        probs = (probs - 0.5) * 2.0

    out_ref[...] = probs * mask              # [tb, C]


def prepare_class_scores(params, doc_dim):
    """Input-independent class-encoder branch, computed once per params.

    Returns p_class = (relu(adj @ features @ w_cls) @ weight).T * (1/sqrt(doc_dim))
    with shape [DOC, C], pre-transposed and pre-scaled for the kernel.
    """
    h = jnp.maximum(params["adj"] @ params["features"] @ params["w_cls"], 0.0)  # [C, dim0]
    p = h @ params["weight"]                                                     # [C, DOC]
    return (p * (1.0 / math.sqrt(doc_dim))).T.astype(jnp.float32)                # [DOC, C]


def text_classifier_forward(x, w_doc, p_class, token_dimension, *,
                            rescaling=False, tile_b=256):
    """x: [B, T + L]  (L == C);  returns [B, C, 1] matching the PyTorch module."""
    B, W = x.shape
    C = p_class.shape[1]

    if x.dtype != jnp.float32:
        x = x.astype(jnp.float32)

    # Batch tiling: single full-array block at small B; sublane-aligned tiles
    # (multiple of 8) with a "parallel" grid axis at serving batch sizes.
    if B <= tile_b:
        tb, b_pad = B, B
    else:
        tb = tile_b                                   # multiple of 8
        b_pad = pl.cdiv(B, tb) * tb
        if b_pad != B:
            x = jnp.pad(x, ((0, b_pad - B), (0, 0)))  # zero mask rows -> zero output

    out = pl.pallas_call(
        functools.partial(classifier_kernel,
                          token_dim=token_dimension, rescaling=rescaling),
        out_shape=jax.ShapeDtypeStruct((b_pad, C), jnp.float32),
        grid=(b_pad // tb,),
        in_specs=[
            pl.BlockSpec((tb, W), lambda i: (i, 0)),          # x tile
            pl.BlockSpec(w_doc.shape, lambda i: (0, 0)),      # resident weights
            pl.BlockSpec(p_class.shape, lambda i: (0, 0)),    # resident class scores
        ],
        out_specs=pl.BlockSpec((tb, C), lambda i: (i, 0)),
        compiler_params=pltpu.CompilerParams(
            dimension_semantics=("parallel",)),
    )(x, w_doc, p_class)

    # torch: p is [B, 1, C]; transpose(1, 2) -> [B, C, 1]
    return out[:B, :, None]


def reference_forward(x, params, token_dimension, rescaling=False):
    """Plain-JAX reference mirroring the PyTorch semantics exactly."""
    tokens = x[:, :token_dimension].astype(jnp.float32)
    mask = x[:, token_dimension:].astype(jnp.float32)
    L = mask.shape[1]
    mask3 = mask.reshape(-1, 1, L)
    d = jnp.tanh(tokens @ params["w_doc"])                 # document_encoder(...)[:, 0, :]
    d = d * (1.0 / math.sqrt(d.shape[1]))
    d = d.reshape(-1, 1, d.shape[1])
    h = jnp.maximum(params["adj"] @ params["features"] @ params["w_cls"], 0.0)
    p = h @ params["weight"]
    p = p.T
    p = d @ p                                              # [B, 1, C]
    if rescaling:
        p = jnp.exp(p)
    p = jax.nn.sigmoid(p)
    if rescaling:
        p = (p - 0.5) * 2.0
    p = mask3 * p
    return jnp.transpose(p, (0, 2, 1))                     # [B, C, 1]


def make_params(key, *, token_dim, doc_dim, dim0, dim1, num_classes, feat_dim):
    ks = jax.random.split(key, 5)
    # nn.Parameter weight: uniform(-stdv, stdv), stdv = 1/sqrt(dimension[1])
    stdv = 1.0 / math.sqrt(dim1)
    weight = jax.random.uniform(ks[0], (dim0, dim1), jnp.float32, -stdv, stdv)
    w_doc = jax.random.normal(ks[1], (token_dim, doc_dim), jnp.float32) * 0.1
    w_cls = jax.random.normal(ks[2], (feat_dim, dim0), jnp.float32) * 0.1
    features = jax.random.normal(ks[3], (num_classes, feat_dim), jnp.float32)
    # simple symmetric-normalized-ish adjacency with self loops
    a = (jax.random.uniform(ks[4], (num_classes, num_classes)) > 0.5).astype(jnp.float32)
    adj = a + a.T + jnp.eye(num_classes, dtype=jnp.float32)
    adj = adj / jnp.sum(adj, axis=1, keepdims=True)
    return {"weight": weight, "w_doc": w_doc, "w_cls": w_cls,
            "features": features, "adj": adj}


if __name__ == "__main__":
    B = 2              # batch
    T = 16             # token_dimension
    C = 8              # num classes == mask length L
    DOC = 32           # document-encoder output dim == dimension[1]
    DIM0 = 32          # dimension[0] (class-encoder output dim)
    F = 16             # class-encoder feature dim

    key = jax.random.PRNGKey(0)
    k_in, k_mask, k_par, k_big = jax.random.split(key, 4)

    params = make_params(k_par, token_dim=T, doc_dim=DOC, dim0=DIM0,
                         dim1=DOC, num_classes=C, feat_dim=F)
    p_class = prepare_class_scores(params, DOC)            # [DOC, C], once per params

    tokens_part = jax.random.normal(k_in, (B, T), jnp.float32)
    mask_part = (jax.random.uniform(k_mask, (B, C)) > 0.3).astype(jnp.float32)
    x = jnp.concatenate([tokens_part, mask_part], axis=1)  # [B, T + C]

    # --- small-batch path (single block, grid of 1) ---
    out = text_classifier_forward(x, params["w_doc"], p_class, token_dimension=T)
    out = jax.block_until_ready(out)
    ref = reference_forward(x, params, token_dimension=T)
    assert out.shape == (B, C, 1), out.shape
    assert jnp.allclose(out, ref, atol=1e-5, rtol=1e-5), "mismatch vs reference (small B)"

    # rescaling=True branch
    out_r = jax.block_until_ready(
        text_classifier_forward(x, params["w_doc"], p_class,
                                token_dimension=T, rescaling=True))
    ref_r = reference_forward(x, params, token_dimension=T, rescaling=True)
    assert jnp.allclose(out_r, ref_r, atol=1e-5, rtol=1e-5), "mismatch vs reference (rescaling)"

    # --- large-batch path (batch grid + padding, exercises tiled BlockSpecs) ---
    B_big = 300
    kb_in, kb_mask = jax.random.split(k_big)
    x_big = jnp.concatenate(
        [jax.random.normal(kb_in, (B_big, T), jnp.float32),
         (jax.random.uniform(kb_mask, (B_big, C)) > 0.3).astype(jnp.float32)], axis=1)
    out_big = jax.block_until_ready(
        text_classifier_forward(x_big, params["w_doc"], p_class, token_dimension=T))
    ref_big = reference_forward(x_big, params, token_dimension=T)
    assert out_big.shape == (B_big, C, 1), out_big.shape
    assert jnp.allclose(out_big, ref_big, atol=1e-5, rtol=1e-5), "mismatch vs reference (big B)"

    print("KERNEL_OK")
</pallas_src>

<mosaic_0001>
module attributes {stable_mosaic.version = 11 : i64} {
  func.func @classifier_kernel(%arg0: i32, %arg1: memref<2x24xf32, #tpu.memory_space<vmem>>, %arg2: memref<16x32xf32, #tpu.memory_space<vmem>>, %arg3: memref<32x8xf32, #tpu.memory_space<vmem>>, %arg4: memref<2x8xf32, #tpu.memory_space<vmem>>) attributes {dimension_semantics = [#tpu.dimension_semantics<parallel>], iteration_bounds = array<i64: 1>, scalar_prefetch = 0 : i64, scratch_operands = 0 : i64, tpu.core_type = #tpu.core_type<tc>, window_params = [{transform_indices = @transform_0, window_bounds = array<i64: 2, 24>}, {pipeline_mode = #tpu.pipeline_mode<synchronous>, transform_indices = @transform_1, window_bounds = array<i64: 16, 32>}, {pipeline_mode = #tpu.pipeline_mode<synchronous>, transform_indices = @transform_2, window_bounds = array<i64: 32, 8>}, {transform_indices = @transform_3, window_bounds = array<i64: 2, 8>}]} {
    %c0 = arith.constant 0 : index
    %c0_0 = arith.constant 0 : index
    %0 = vector.load %arg1[%c0, %c0_0] : memref<2x24xf32, #tpu.memory_space<vmem>>, vector<2x24xf32>
    %1 = vector.extract_strided_slice %0 {offsets = [0, 0], sizes = [2, 16], strides = [1, 1]} : vector<2x24xf32> to vector<2x16xf32>
    %2 = vector.extract_strided_slice %0 {offsets = [0, 16], sizes = [2, 8], strides = [1, 1]} : vector<2x24xf32> to vector<2x8xf32>
    %c0_1 = arith.constant 0 : index
    %c0_2 = arith.constant 0 : index
    %3 = vector.load %arg2[%c0_1, %c0_2] : memref<16x32xf32, #tpu.memory_space<vmem>>, vector<16x32xf32>
    %cst = arith.constant dense<0.000000e+00> : vector<2x32xf32>
    %4 = tpu.matmul %1, %3, %cst {dimension_numbers = #tpu.dot_dimension_numbers<[1], [0], [0], [1], [0, 0, 1, 1], [], []>} : vector<2x16xf32>, vector<16x32xf32>, vector<2x32xf32> -> vector<2x32xf32>
    %5 = math.tanh %4 : vector<2x32xf32>
    %c0_3 = arith.constant 0 : index
    %c0_4 = arith.constant 0 : index
    %6 = vector.load %arg3[%c0_3, %c0_4] : memref<32x8xf32, #tpu.memory_space<vmem>>, vector<32x8xf32>
    %cst_5 = arith.constant dense<0.000000e+00> : vector<2x8xf32>
    %7 = tpu.matmul %5, %6, %cst_5 {dimension_numbers = #tpu.dot_dimension_numbers<[1], [0], [0], [1], [0, 0, 1, 1], [], []>} : vector<2x32xf32>, vector<32x8xf32>, vector<2x8xf32> -> vector<2x8xf32>
    %8 = arith.negf %7 : vector<2x8xf32>
    %9 = math.exp %8 : vector<2x8xf32>
    %cst_6 = arith.constant 1.000000e+00 : f32
    %10 = vector.broadcast %cst_6 : f32 to vector<2x8xf32>
    %11 = arith.addf %10, %9 : vector<2x8xf32>
    %12 = arith.divf %10, %11 : vector<2x8xf32>
    %13 = arith.mulf %12, %2 : vector<2x8xf32>
    %c0_7 = arith.constant 0 : index
    %c0_8 = arith.constant 0 : index
    %14 = vector.load %arg4[%c0_7, %c0_8] : memref<2x8xf32, #tpu.memory_space<vmem>>, vector<2x8xf32>
    tpu.vector_store %arg4[%c0_7, %c0_8], %13 {strides = array<i32>} : memref<2x8xf32, #tpu.memory_space<vmem>>, vector<2x8xf32>,
    return
  }
  func.func @transform_0(%arg0: i32) -> (i32, i32) {
    %c0_i32 = arith.constant 0 : i32
    %c0_i32_0 = arith.constant 0 : i32
    return %arg0, %c0_i32 : i32, i32
  }
  func.func @transform_1(%arg0: i32) -> (i32, i32) {
    %c0_i32 = arith.constant 0 : i32
    %c0_i32_0 = arith.constant 0 : i32
    %c0_i32_1 = arith.constant 0 : i32
    return %c0_i32, %c0_i32_0 : i32, i32
  }
  func.func @transform_2(%arg0: i32) -> (i32, i32) {
    %c0_i32 = arith.constant 0 : i32
    %c0_i32_0 = arith.constant 0 : i32
    %c0_i32_1 = arith.constant 0 : i32
    return %c0_i32, %c0_i32_0 : i32, i32
  }
  func.func @transform_3(%arg0: i32) -> (i32, i32) {
    %c0_i32 = arith.constant 0 : i32
    %c0_i32_0 = arith.constant 0 : i32
    return %arg0, %c0_i32 : i32, i32
  }
}

</mosaic_0001>

<llo_original>
// kernel: tpu_custom_call.1
$region0: #{tpu_custom_call.1}
  #allocation0 [shape = 'u32[]', space=smem, size = 0x4, offset = 0x4, fixed_abs, tag = 'smem constant byte address 0x4 - core index']
  #allocation1 [shape = 'u32[144,128]{1,0:T(1,128)}', space=vmem, size = 0x12000, scoped, tag = 'internal scratch']
  %s0 = inlined_call_operand.vmem [shape: f32[2,24], index: 0, kind: input, shape index: {}]
  %s1 = inlined_call_operand.vmem [shape: f32[16,32], index: 1, kind: input, shape index: {}]
  %s2 = inlined_call_operand.vmem [shape: f32[32,8], index: 2, kind: input, shape index: {}]
  %s3 = inlined_call_operand.hbm [shape: f32[2,8], index: 3, kind: output, shape index: {}]
  %s4 = sld [smem:[#allocation0]]
  $region22: #{tpu_custom_call.1} parent=0
    _
  %s6 = ssub.s32 1, %s4
  %s7 = scalar_select 0, %s6, %s4
  $region1: #{tpu_custom_call.1} parent=0
    #allocation2 [shape = 'u8[1024]{0}', space=vmem, size = 0x400, scoped, tag = 'output window, operand 0, single buffered']
    #allocation3 [shape = 's32[1]{0}', space=sflag, size = 0x4, scoped, tag = 'scoped memory for tpu_custom_call.1']
    %8 = vsyncpa [#allocation3], 0
    // Predicated region
    $region2: #{tpu_custom_call.1} parent=1 // pred_check
      _
    $region3: #{tpu_custom_call.1} parent=1 // pred_check_branch
      %10 = sbr.rel (0) target = $region5
    $region4: #{tpu_custom_call.1} parent=1 // pred_region
      _
    $region5: #{tpu_custom_call.1} parent=1 // pred_fallthru
      _
    // Predicated region
    $region6: #{tpu_custom_call.1} parent=1 // pred_check
      _
    $region7: #{tpu_custom_call.1} parent=1 // pred_check_branch
      %12 = sbr.rel (0) target = $region9
    $region8: #{tpu_custom_call.1} parent=1 // pred_region
      _
    $region9: #{tpu_custom_call.1} parent=1 // pred_fallthru
      _
    // Predicated region
    $region10: #{tpu_custom_call.1} parent=1 // pred_check
      _
    $region11: #{tpu_custom_call.1} parent=1 // pred_check_branch
      %14 = sbr.rel (0) target = $region13
    $region12: #{tpu_custom_call.1} parent=1 // pred_region
      _
    $region13: #{tpu_custom_call.1} parent=1 // pred_fallthru
      _
    %v15 = vld [vmem:[%s0] sm:$0x3]
    %v16 = vld [vmem:[%s1] sm:$0xff]
    %v17 = vld [vmem:[%s1 + $0x8] sm:$0xff]
    %vm18 = vcmask 130048
    %v20 = vsel %vm18, %v15, 0
    %22 = vmatprep.subr.mxu0 0.0
    %23 = vmatpush1.msra.mxu0 0.0
    %24 = vmatprep.subr.mxu0 0.0
    %25 = vmatpush1.msra.mxu0 0.0
    %26 = vmatprep.subr.mxu0 0.0
    %27 = vmatpush1.msra.mxu0 0.0
    %28 = vmatprep.subr.mxu0 0.0
    %29 = vmatpush1.msra.mxu0 0.0
    %30 = vmatprep.subr.mxu0 0.0
    %31 = vmatpush1.msra.mxu0 0.0
    %32 = vmatprep.subr.mxu0 0.0
    %33 = vmatpush1.msra.mxu0 0.0
    %34 = vmatprep.subr.mxu0 0.0
    %35 = vmatpush1.msra.mxu0 0.0
    %36 = vmatprep.subr.mxu0 0.0
    %37 = vmatpush1.msra.mxu0 0.0
    %38 = vmatprep.subr.mxu0 0.0
    %39 = vmatpush1.msra.mxu0 0.0
    %40 = vmatprep.subr.mxu0 0.0
    %41 = vmatpush1.msra.mxu0 0.0
    %42 = vmatprep.subr.mxu0 0.0
    %43 = vmatpush1.msra.mxu0 0.0
    %44 = vmatprep.subr.mxu0 0.0
    %45 = vmatpush1.msra.mxu0 0.0
    %46 = vmatprep.subr.mxu0 0.0
    %47 = vmatpush1.msra.mxu0 0.0
    %48 = vmatprep.subr.mxu0 0.0
    %49 = vmatpush1.msra.mxu0 0.0
    %50 = vmatprep.subr.mxu0 0.0
    %51 = vmatpush1.msra.mxu0 %v17
    %52 = vmatprep.subr.mxu0 0.0
    %53 = vmatpush1.msra.mxu0 %v16
    %54 = vmatprep.subr.mxu0 0.0
    %55 = vmatpush2.msra.mxu0 0.0
    %56 = vmatprep.subr.mxu0 0.0
    %57 = vmatpush2.msra.mxu0 0.0
    %58 = vmatprep.subr.mxu0 0.0
    %59 = vmatpush2.msra.mxu0 0.0
    %60 = vmatprep.subr.mxu0 0.0
    %61 = vmatpush2.msra.mxu0 0.0
    %62 = vmatprep.subr.mxu0 0.0
    %63 = vmatpush2.msra.mxu0 0.0
    %64 = vmatprep.subr.mxu0 0.0
    %65 = vmatpush2.msra.mxu0 0.0
    %66 = vmatprep.subr.mxu0 0.0
    %67 = vmatpush2.msra.mxu0 0.0
    %68 = vmatprep.subr.mxu0 0.0
    %69 = vmatpush2.msra.mxu0 0.0
    %70 = vmatprep.subr.mxu0 0.0
    %71 = vmatpush2.msra.mxu0 0.0
    %72 = vmatprep.subr.mxu0 0.0
    %73 = vmatpush2.msra.mxu0 0.0
    %74 = vmatprep.subr.mxu0 0.0
    %75 = vmatpush2.msra.mxu0 0.0
    %76 = vmatprep.subr.mxu0 0.0
    %77 = vmatpush2.msra.mxu0 0.0
    %78 = vmatprep.subr.mxu0 0.0
    %79 = vmatpush2.msra.mxu0 0.0
    %80 = vmatprep.subr.mxu0 0.0
    %81 = vmatpush2.msra.mxu0 0.0
    %82 = vmatprep.subr.mxu0 0.0
    %83 = vmatpush2.msra.mxu0 0.0
    %84 = vmatprep.subr.mxu0 0.0
    %85 = vmatpush2.msra.mxu0 0.0
    %86 = vmatprep.mubr.f32.mxu0 0.0
    %87 = vmatmul.mubr.f32.gmra.mxu0 %v20
    %v88 = vpop.f32.mrf.mxu0
    %v89 = vadd.f32 0.0, %v88
    %v90 = vpop.f32.mrf.mxu0
    %91 = vdwg.mxu0
    %v92 = vtanh.pop %v89
    %v93 = vld [vmem:[%s2] sm:$0xff]
    %v94 = vld [vmem:[%s2 + $0x8] sm:$0xff]
    %v95 = vld [vmem:[%s2 + $0x10] sm:$0xff]
    %v96 = vld [vmem:[%s2 + $0x18] sm:$0xff]
    %vm97 = vcmask 261120
    %v99 = vsel %vm97, %v92, 0
    %101 = vmatprep.subr.mxu0 0.0
    %102 = vmatpush1.msra.mxu0 0.0
    %103 = vmatprep.subr.mxu0 0.0
    %104 = vmatpush1.msra.mxu0 0.0
    %105 = vmatprep.subr.mxu0 0.0
    %106 = vmatpush1.msra.mxu0 0.0
    %107 = vmatprep.subr.mxu0 0.0
    %108 = vmatpush1.msra.mxu0 0.0
    %109 = vmatprep.subr.mxu0 0.0
    %110 = vmatpush1.msra.mxu0 0.0
    %111 = vmatprep.subr.mxu0 0.0
    %112 = vmatpush1.msra.mxu0 0.0
    %113 = vmatprep.subr.mxu0 0.0
    %114 = vmatpush1.msra.mxu0 0.0
    %115 = vmatprep.subr.mxu0 0.0
    %116 = vmatpush1.msra.mxu0 0.0
    %117 = vmatprep.subr.mxu0 0.0
    %118 = vmatpush1.msra.mxu0 0.0
    %119 = vmatprep.subr.mxu0 0.0
    %120 = vmatpush1.msra.mxu0 0.0
    %121 = vmatprep.subr.mxu0 0.0
    %122 = vmatpush1.msra.mxu0 0.0
    %123 = vmatprep.subr.mxu0 0.0
    %124 = vmatpush1.msra.mxu0 0.0
    %125 = vmatprep.subr.mxu0 0.0
    %126 = vmatpush1.msra.mxu0 %v96
    %127 = vmatprep.subr.mxu0 0.0
    %128 = vmatpush1.msra.mxu0 %v95
    %129 = vmatprep.subr.mxu0 0.0
    %130 = vmatpush1.msra.mxu0 %v94
    %131 = vmatprep.subr.mxu0 0.0
    %132 = vmatpush1.msra.mxu0 %v93
    %133 = vmatprep.subr.mxu0 0.0
    %134 = vmatpush2.msra.mxu0 0.0
    %135 = vmatprep.subr.mxu0 0.0
    %136 = vmatpush2.msra.mxu0 0.0
    %137 = vmatprep.subr.mxu0 0.0
    %138 = vmatpush2.msra.mxu0 0.0
    %139 = vmatprep.subr.mxu0 0.0
    %140 = vmatpush2.msra.mxu0 0.0
    %141 = vmatprep.subr.mxu0 0.0
    %142 = vmatpush2.msra.mxu0 0.0
    %143 = vmatprep.subr.mxu0 0.0
    %144 = vmatpush2.msra.mxu0 0.0
    %145 = vmatprep.subr.mxu0 0.0
    %146 = vmatpush2.msra.mxu0 0.0
    %147 = vmatprep.subr.mxu0 0.0
    %148 = vmatpush2.msra.mxu0 0.0
    %149 = vmatprep.subr.mxu0 0.0
    %150 = vmatpush2.msra.mxu0 0.0
    %151 = vmatprep.subr.mxu0 0.0
    %152 = vmatpush2.msra.mxu0 0.0
    %153 = vmatprep.subr.mxu0 0.0
    %154 = vmatpush2.msra.mxu0 0.0
    %155 = vmatprep.subr.mxu0 0.0
    %156 = vmatpush2.msra.mxu0 0.0
    %157 = vmatprep.subr.mxu0 0.0
    %158 = vmatpush2.msra.mxu0 0.0
    %159 = vmatprep.subr.mxu0 0.0
    %160 = vmatpush2.msra.mxu0 0.0
    %161 = vmatprep.subr.mxu0 0.0
    %162 = vmatpush2.msra.mxu0 0.0
    %163 = vmatprep.subr.mxu0 0.0
    %164 = vmatpush2.msra.mxu0 0.0
    %165 = vmatprep.mubr.f32.mxu0 0.0
    %166 = vmatmul.mubr.f32.gmra.mxu0 %v99
    %v167 = vpop.f32.mrf.mxu0
    %v168 = vadd.f32 0.0, %v167
    %v169 = vpop.f32.mrf.mxu0
    %170 = vdwg.mxu0
    %v171 = vxor.u32 %v168, 2147483648
    %v172 = vmul.f32 %v171, 1.442695
    %v173 = vpow.pop %v172
    %v174 = vadd.f32 %v173, 1.0
    %v175 = vrcp.pop %v174
    %v176 = vmul.f32 1.0, %v175
    %177 = vrot.lane.b32.xlu0 %v15, 112
    %v178 = vpop.permute.xlu0 %177
    %v180 = vmul.f32 %v176, %v178
    %vm181 = vcmask 58368
    %182 = vst.msk [vmem:[#allocation2] sm:$0x3] %vm181, %v180
    // Predicated region
    $region14: #{tpu_custom_call.1} parent=1 // pred_check
      _
    $region15: #{tpu_custom_call.1} parent=1 // pred_check_branch
      %184 = sbr.rel (0) target = $region17
    $region16: #{tpu_custom_call.1} parent=1 // pred_region
      %s186 = ssub.s32 32, 32
      %187 = vsyncadd [#allocation3], %s186
      %s189 = sshll.u32 [#allocation2], 4
      %s190 = int_to_ptr.vmem [resolvable:$true] %s189
      %192 = dma.vmem_to_hbm [thread:$0]  %s190, 32, %s3, [#allocation3]
    $region17: #{tpu_custom_call.1} parent=1 // pred_fallthru
      _
    // Predicated region
    $region18: #{tpu_custom_call.1} parent=1 // pred_check
      _
    $region19: #{tpu_custom_call.1} parent=1 // pred_check_branch
      %194 = sbr.rel (0) target = $region21
    $region20: #{tpu_custom_call.1} parent=1 // pred_region
      %195 = dma.done [#allocation3], 32
    $region21: #{tpu_custom_call.1} parent=1 // pred_fallthru
      _
    %196 = vsyncpa [#allocation3], 1

</llo_original>
